<compile_context>
chip_gen: v7x
topology: tpu7x:2x2x1
jax: 0.10.0
libtpu: 0.0.40
codegen_flags: <defaults>
</compile_context>

<pallas_src>
import functools

import jax
import jax.numpy as jnp
from jax.experimental import pallas as pl
from jax.experimental.pallas import tpu as pltpu

LANE = 128
SUBLANE = 8


def _round_up(n, m):
    return ((n + m - 1) // m) * m


def _cdiv(a, b):
    return (a + b - 1) // b


# ------------------------------- kernel ------------------------------------ #

def _make_fused_kernel(head_layout):
    """head_layout: tuple of (kind, col_offset, real_dim) with kind in
    {"softmax", "sigmoid", "softplus"}.  All heads live contiguously inside a
    single lane-dense slab of width total_pad (a multiple of 128)."""

    def kernel(x_ref, w1_ref, b1_ref, wh_ref, bh_ref, o_ref):
        # h = relu(x @ W1 + b1): stays in vregs/VMEM, never touches HBM.
        h = jnp.dot(x_ref[...], w1_ref[...], preferred_element_type=jnp.float32)
        h = jnp.maximum(h + b1_ref[...], 0.0)

        # One lane-dense MXU matmul for ALL heads at once.
        z = jnp.dot(h, wh_ref[...], preferred_element_type=jnp.float32)
        z = z + bh_ref[...]

        # Per-head lane-segment masks (compile-time constant pattern).
        col = jax.lax.broadcasted_iota(jnp.int32, (1, z.shape[1]), 1)
        out = jnp.zeros_like(z)
        for kind, off, dim in head_layout:
            mask = (col >= off) & (col < off + dim)
            if kind == "softmax":
                zk = jnp.where(mask, z, -jnp.inf)
                zk = zk - jnp.max(zk, axis=-1, keepdims=True)
                e = jnp.exp(zk)                       # exp(-inf)==0 off-segment
                # Exact divide: rows must sum to 1 for PPO log-prob/ratio math.
                val = e / jnp.sum(e, axis=-1, keepdims=True)
            elif kind == "sigmoid":
                val = 1.0 / (1.0 + jnp.exp(-z))
            else:  # softplus(z) + 1e-5, numerically stable
                val = jnp.maximum(z, 0.0) + jnp.log1p(jnp.exp(-jnp.abs(z))) + 1e-5
            out = jnp.where(mask, val, out)
        o_ref[...] = out

    return kernel


# --------------------------- parameter setup ------------------------------- #

def init_params(key, state_dim, hidden_dim, discrete_action_dims,
                continuous_action_dim):
    """Deterministic PyTorch-style uniform(-1/sqrt(fan_in)) init.
    Weights stored as [in_features, out_features] so the MXU computes
    y = x @ W + b directly."""
    def linear(key, fan_in, fan_out):
        kw, kb = jax.random.split(key)
        bound = 1.0 / jnp.sqrt(jnp.float32(fan_in))
        w = jax.random.uniform(kw, (fan_in, fan_out), jnp.float32, -bound, bound)
        b = jax.random.uniform(kb, (fan_out,), jnp.float32, -bound, bound)
        return w, b

    keys = jax.random.split(key, 3 + len(discrete_action_dims))
    params = {
        "fc1": linear(keys[0], state_dim, hidden_dim),
        "discrete": [linear(keys[1 + i], hidden_dim, dim)
                     for i, dim in enumerate(discrete_action_dims)],
        "mean": linear(keys[1 + len(discrete_action_dims)],
                       hidden_dim, continuous_action_dim),
        "std": linear(keys[2 + len(discrete_action_dims)],
                      hidden_dim, continuous_action_dim),
    }
    return params


def pack_params(params, discrete_action_dims, continuous_action_dim):
    """One-time host-side packing: concatenate ALL head columns contiguously
    and pad only the TOTAL up to a 128-lane multiple."""
    w1, b1 = params["fc1"]
    heads = list(params["discrete"]) + [params["mean"], params["std"]]
    wh = jnp.concatenate([w.astype(jnp.float32) for (w, _) in heads], axis=1)
    bh = jnp.concatenate([b.astype(jnp.float32) for (_, b) in heads])
    total = wh.shape[1]
    total_pad = _round_up(total, LANE)
    wh = jnp.pad(wh, ((0, 0), (0, total_pad - total)))
    bh = jnp.pad(bh, (0, total_pad - total))
    return {
        "w1": w1.astype(jnp.float32),
        "b1": b1.astype(jnp.float32)[None, :],
        "wh": wh,
        "bh": bh[None, :],
    }


# ------------------------------ forward ------------------------------------ #

@functools.partial(jax.jit,
                   static_argnames=("discrete_action_dims",
                                    "continuous_action_dim",
                                    "single_buffer_weights"))
def mixed_policy_net_forward(packed, x, *, discrete_action_dims,
                             continuous_action_dim,
                             single_buffer_weights=True):
    w1, b1, wh, bh = packed["w1"], packed["b1"], packed["wh"], packed["bh"]
    state_dim, hidden_dim = w1.shape
    total_pad = wh.shape[1]

    dims = list(discrete_action_dims) + [continuous_action_dim,
                                         continuous_action_dim]
    kinds = (["softmax"] * len(discrete_action_dims)) + ["sigmoid", "softplus"]
    offs, off = [], 0
    for d in dims:
        offs.append(off)
        off += d
    total_real = off
    head_layout = tuple(zip(kinds, offs, dims))

    batch = x.shape[0]
    # Batch tiling: tiny batches use a full-extent block (always layout-legal);
    # larger batches get >= 2 grid steps (v7x megacore) capped at 512 rows.
    if batch <= SUBLANE:
        block_b = batch
    else:
        block_b = max(SUBLANE, min(512, _round_up(_cdiv(batch, 2), SUBLANE)))
    grid = (_cdiv(batch, block_b),)   # no host-side pad of x; ragged last tile
                                      # is row-local and OOB writes are masked.

    x = x.astype(jnp.float32)

    def _const_map(i):
        return (0, 0)

    weight_kwargs = {}
    if single_buffer_weights:
        # Constant index_map -> resident weights; double-buffering buys nothing.
        weight_kwargs = dict(pipeline_mode=pl.Buffered(1))

    in_specs = [
        pl.BlockSpec((block_b, state_dim), lambda i: (i, 0)),               # x
        pl.BlockSpec((state_dim, hidden_dim), _const_map, **weight_kwargs), # W1
        pl.BlockSpec((1, hidden_dim), _const_map, **weight_kwargs),         # b1
        pl.BlockSpec((hidden_dim, total_pad), _const_map, **weight_kwargs), # Wh
        pl.BlockSpec((1, total_pad), _const_map, **weight_kwargs),          # bh
    ]
    out_specs = pl.BlockSpec((block_b, total_pad), lambda i: (i, 0))

    # Explicit VMEM budget: batch-tiled blocks (x2 buffers) + resident weights
    # + implicit h / z temporaries, with 2x margin (matters on v7x's 64 MiB).
    F32 = 4
    tile_bytes = block_b * (state_dim + total_pad) * F32 * 2
    weight_bytes = (state_dim * hidden_dim + hidden_dim
                    + hidden_dim * total_pad + total_pad) * F32
    temp_bytes = block_b * (hidden_dim + total_pad) * F32 * 2
    vmem_limit = int(min(max(2 * (tile_bytes + weight_bytes + temp_bytes),
                             16 * 2**20), 48 * 2**20))

    n_softmax = len(discrete_action_dims)
    cost = pl.CostEstimate(
        flops=2 * batch * (state_dim * hidden_dim + hidden_dim * total_pad),
        transcendentals=batch * total_pad * (n_softmax + 2),
        bytes_accessed=(batch * (state_dim + total_pad)
                        + state_dim * hidden_dim + hidden_dim
                        + hidden_dim * total_pad + total_pad) * F32,
    )

    out = pl.pallas_call(
        _make_fused_kernel(head_layout),
        out_shape=jax.ShapeDtypeStruct((batch, total_pad), jnp.float32),
        grid=grid,
        in_specs=in_specs,
        out_specs=out_specs,
        compiler_params=pltpu.CompilerParams(
            dimension_semantics=("parallel",),
            vmem_limit_bytes=vmem_limit),
        cost_estimate=cost,
    )(x, w1, b1, wh, bh)

    # Single contiguous un-pad, then cheap per-head splits.
    out_real = out[:, :total_real]
    results = [out_real[:, o:o + d] for o, d in zip(offs, dims)]
    n_disc = len(discrete_action_dims)
    return results[:n_disc], results[n_disc], results[n_disc + 1]


# --------------------------- pure-JAX reference ----------------------------- #

def reference_forward(params, x):
    w1, b1 = params["fc1"]
    h = jnp.maximum(x @ w1 + b1, 0.0)
    probs = [jax.nn.softmax(h @ w + b, axis=1) for (w, b) in params["discrete"]]
    wm, bm = params["mean"]
    ws, bs = params["std"]
    mean = jax.nn.sigmoid(h @ wm + bm)
    std = jax.nn.softplus(h @ ws + bs) + 1e-5
    return probs, mean, std


# -------------------------------- main -------------------------------------- #

if __name__ == "__main__":
    batch = 2
    state_dim = 16
    hidden_dim = 32
    discrete_action_dims = (3, 5)
    continuous_action_dim = 4

    key = jax.random.PRNGKey(0)
    pkey, xkey = jax.random.split(key)
    params = init_params(pkey, state_dim, hidden_dim, discrete_action_dims,
                         continuous_action_dim)
    packed = pack_params(params, discrete_action_dims, continuous_action_dim)
    x = jax.random.normal(xkey, (batch, state_dim), jnp.float32)

    fwd = functools.partial(mixed_policy_net_forward,
                            discrete_action_dims=discrete_action_dims,
                            continuous_action_dim=continuous_action_dim)
    try:
        outs = fwd(packed, x, single_buffer_weights=True)
        jax.block_until_ready(outs)
    except Exception:
        # Fallback if this JAX build rejects pl.Buffered(1) single-buffering.
        outs = fwd(packed, x, single_buffer_weights=False)
        jax.block_until_ready(outs)
    probs_discrete, mean_c, std_c = outs

    # Correctness vs pure-JAX reference (exact divides -> tight tolerances).
    ref_probs, ref_mean, ref_std = reference_forward(params, x)
    for p, rp, d in zip(probs_discrete, ref_probs, discrete_action_dims):
        assert p.shape == (batch, d)
        assert jnp.allclose(p, rp, rtol=1e-3, atol=1e-4)
        assert jnp.allclose(jnp.sum(p, axis=1), 1.0, atol=1e-4)
    assert mean_c.shape == (batch, continuous_action_dim)
    assert std_c.shape == (batch, continuous_action_dim)
    assert jnp.allclose(mean_c, ref_mean, rtol=1e-3, atol=1e-4)
    assert jnp.allclose(std_c, ref_std, rtol=1e-3, atol=1e-4)
    assert bool(jnp.all(std_c > 0))

    print("KERNEL_OK")
</pallas_src>

<mosaic_0001>
module attributes {stable_mosaic.version = 11 : i64} {
  func.func @kernel(%arg0: i32, %arg1: memref<2x16xf32, #tpu.memory_space<vmem>>, %arg2: memref<16x32xf32, #tpu.memory_space<vmem>>, %arg3: memref<1x32xf32, #tpu.memory_space<vmem>>, %arg4: memref<32x128xf32, #tpu.memory_space<vmem>>, %arg5: memref<1x128xf32, #tpu.memory_space<vmem>>, %arg6: memref<2x128xf32, #tpu.memory_space<vmem>>) attributes {dimension_semantics = [#tpu.dimension_semantics<parallel>], iteration_bounds = array<i64: 1>, scalar_prefetch = 0 : i64, scratch_operands = 0 : i64, tpu.core_type = #tpu.core_type<tc>, window_params = [{transform_indices = @transform_0, window_bounds = array<i64: 2, 16>}, {pipeline_mode = #tpu.pipeline_mode<synchronous>, transform_indices = @transform_1, window_bounds = array<i64: 16, 32>}, {pipeline_mode = #tpu.pipeline_mode<synchronous>, transform_indices = @transform_2, window_bounds = array<i64: 1, 32>}, {pipeline_mode = #tpu.pipeline_mode<synchronous>, transform_indices = @transform_3, window_bounds = array<i64: 32, 128>}, {pipeline_mode = #tpu.pipeline_mode<synchronous>, transform_indices = @transform_4, window_bounds = array<i64: 1, 128>}, {transform_indices = @transform_5, window_bounds = array<i64: 2, 128>}]} {
    %c0 = arith.constant 0 : index
    %c0_0 = arith.constant 0 : index
    %0 = vector.load %arg1[%c0, %c0_0] : memref<2x16xf32, #tpu.memory_space<vmem>>, vector<2x16xf32>
    %c0_1 = arith.constant 0 : index
    %c0_2 = arith.constant 0 : index
    %1 = vector.load %arg2[%c0_1, %c0_2] : memref<16x32xf32, #tpu.memory_space<vmem>>, vector<16x32xf32>
    %cst = arith.constant dense<0.000000e+00> : vector<2x32xf32>
    %2 = tpu.matmul %0, %1, %cst {dimension_numbers = #tpu.dot_dimension_numbers<[1], [0], [0], [1], [0, 0, 1, 1], [], []>} : vector<2x16xf32>, vector<16x32xf32>, vector<2x32xf32> -> vector<2x32xf32>
    %c0_3 = arith.constant 0 : index
    %c0_4 = arith.constant 0 : index
    %3 = vector.load %arg3[%c0_3, %c0_4] : memref<1x32xf32, #tpu.memory_space<vmem>>, vector<1x32xf32>
    %4 = vector.broadcast %3 : vector<1x32xf32> to vector<2x32xf32>
    %5 = arith.addf %2, %4 : vector<2x32xf32>
    %cst_5 = arith.constant 0.000000e+00 : f32
    %6 = vector.broadcast %cst_5 : f32 to vector<2x32xf32>
    %7 = arith.maximumf %5, %6 : vector<2x32xf32>
    %c0_6 = arith.constant 0 : index
    %c0_7 = arith.constant 0 : index
    %8 = vector.load %arg4[%c0_6, %c0_7] : memref<32x128xf32, #tpu.memory_space<vmem>>, vector<32x128xf32>
    %cst_8 = arith.constant dense<0.000000e+00> : vector<2x128xf32>
    %9 = tpu.matmul %7, %8, %cst_8 {dimension_numbers = #tpu.dot_dimension_numbers<[1], [0], [0], [1], [0, 0, 1, 1], [], []>} : vector<2x32xf32>, vector<32x128xf32>, vector<2x128xf32> -> vector<2x128xf32>
    %c0_9 = arith.constant 0 : index
    %c0_10 = arith.constant 0 : index
    %10 = vector.load %arg5[%c0_9, %c0_10] : memref<1x128xf32, #tpu.memory_space<vmem>>, vector<1x128xf32>
    %11 = vector.broadcast %10 : vector<1x128xf32> to vector<2x128xf32>
    %12 = arith.addf %9, %11 : vector<2x128xf32>
    %13 = tpu.iota {dimensions = array<i32: 1>} : vector<1x128xi32>
    %cst_11 = arith.constant 0.000000e+00 : f32
    %14 = vector.broadcast %cst_11 : f32 to vector<2x128xf32>
    %c0_i32 = arith.constant 0 : i32
    %15 = vector.broadcast %c0_i32 : i32 to vector<1x128xi32>
    %16 = arith.cmpi sge, %13, %15 : vector<1x128xi32>
    %c3_i32 = arith.constant 3 : i32
    %17 = vector.broadcast %c3_i32 : i32 to vector<1x128xi32>
    %18 = arith.cmpi slt, %13, %17 : vector<1x128xi32>
    %19 = arith.andi %16, %18 : vector<1x128xi1>
    %cst_12 = arith.constant 0xFF800000 : f32
    %20 = vector.shape_cast %19 : vector<1x128xi1> to vector<1x128xi1>
    %21 = vector.broadcast %20 : vector<1x128xi1> to vector<2x128xi1>
    %22 = vector.broadcast %cst_12 : f32 to vector<2x128xf32>
    %23 = arith.select %21, %12, %22 : vector<2x128xi1>, vector<2x128xf32>
    %cst_13 = arith.constant dense<0xFF800000> : vector<2xf32>
    %24 = vector.multi_reduction <maximumf>, %23, %cst_13 [1] : vector<2x128xf32> to vector<2xf32>
    %25 = vector.shape_cast %24 : vector<2xf32> to vector<2x1xf32>
    %26 = vector.broadcast %25 : vector<2x1xf32> to vector<2x128xf32>
    %27 = arith.subf %23, %26 : vector<2x128xf32>
    %28 = math.exp %27 : vector<2x128xf32>
    %cst_14 = arith.constant dense<0.000000e+00> : vector<2xf32>
    %29 = vector.multi_reduction <add>, %28, %cst_14 [1] : vector<2x128xf32> to vector<2xf32>
    %30 = vector.shape_cast %29 : vector<2xf32> to vector<2x1xf32>
    %31 = vector.broadcast %30 : vector<2x1xf32> to vector<2x128xf32>
    %32 = arith.divf %28, %31 : vector<2x128xf32>
    %33 = vector.shape_cast %19 : vector<1x128xi1> to vector<1x128xi1>
    %34 = vector.broadcast %33 : vector<1x128xi1> to vector<2x128xi1>
    %35 = arith.select %34, %32, %14 : vector<2x128xi1>, vector<2x128xf32>
    %c3_i32_15 = arith.constant 3 : i32
    %36 = vector.broadcast %c3_i32_15 : i32 to vector<1x128xi32>
    %37 = arith.cmpi sge, %13, %36 : vector<1x128xi32>
    %c8_i32 = arith.constant 8 : i32
    %38 = vector.broadcast %c8_i32 : i32 to vector<1x128xi32>
    %39 = arith.cmpi slt, %13, %38 : vector<1x128xi32>
    %40 = arith.andi %37, %39 : vector<1x128xi1>
    %cst_16 = arith.constant 0xFF800000 : f32
    %41 = vector.shape_cast %40 : vector<1x128xi1> to vector<1x128xi1>
    %42 = vector.broadcast %41 : vector<1x128xi1> to vector<2x128xi1>
    %43 = vector.broadcast %cst_16 : f32 to vector<2x128xf32>
    %44 = arith.select %42, %12, %43 : vector<2x128xi1>, vector<2x128xf32>
    %cst_17 = arith.constant dense<0xFF800000> : vector<2xf32>
    %45 = vector.multi_reduction <maximumf>, %44, %cst_17 [1] : vector<2x128xf32> to vector<2xf32>
    %46 = vector.shape_cast %45 : vector<2xf32> to vector<2x1xf32>
    %47 = vector.broadcast %46 : vector<2x1xf32> to vector<2x128xf32>
    %48 = arith.subf %44, %47 : vector<2x128xf32>
    %49 = math.exp %48 : vector<2x128xf32>
    %cst_18 = arith.constant dense<0.000000e+00> : vector<2xf32>
    %50 = vector.multi_reduction <add>, %49, %cst_18 [1] : vector<2x128xf32> to vector<2xf32>
    %51 = vector.shape_cast %50 : vector<2xf32> to vector<2x1xf32>
    %52 = vector.broadcast %51 : vector<2x1xf32> to vector<2x128xf32>
    %53 = arith.divf %49, %52 : vector<2x128xf32>
    %54 = vector.shape_cast %40 : vector<1x128xi1> to vector<1x128xi1>
    %55 = vector.broadcast %54 : vector<1x128xi1> to vector<2x128xi1>
    %56 = arith.select %55, %53, %35 : vector<2x128xi1>, vector<2x128xf32>
    %c8_i32_19 = arith.constant 8 : i32
    %57 = vector.broadcast %c8_i32_19 : i32 to vector<1x128xi32>
    %58 = arith.cmpi sge, %13, %57 : vector<1x128xi32>
    %c12_i32 = arith.constant 12 : i32
    %59 = vector.broadcast %c12_i32 : i32 to vector<1x128xi32>
    %60 = arith.cmpi slt, %13, %59 : vector<1x128xi32>
    %61 = arith.andi %58, %60 : vector<1x128xi1>
    %cst_20 = arith.constant 0.000000e+00 : f32
    %62 = vector.broadcast %cst_20 : f32 to vector<2x128xf32>
    %63 = arith.subf %62, %12 : vector<2x128xf32>
    %64 = math.exp %63 : vector<2x128xf32>
    %cst_21 = arith.constant 1.000000e+00 : f32
    %65 = vector.broadcast %cst_21 : f32 to vector<2x128xf32>
    %66 = arith.addf %65, %64 : vector<2x128xf32>
    %cst_22 = arith.constant 1.000000e+00 : f32
    %67 = vector.broadcast %cst_22 : f32 to vector<2x128xf32>
    %68 = arith.divf %67, %66 : vector<2x128xf32>
    %69 = vector.shape_cast %61 : vector<1x128xi1> to vector<1x128xi1>
    %70 = vector.broadcast %69 : vector<1x128xi1> to vector<2x128xi1>
    %71 = arith.select %70, %68, %56 : vector<2x128xi1>, vector<2x128xf32>
    %c12_i32_23 = arith.constant 12 : i32
    %72 = vector.broadcast %c12_i32_23 : i32 to vector<1x128xi32>
    %73 = arith.cmpi sge, %13, %72 : vector<1x128xi32>
    %c16_i32 = arith.constant 16 : i32
    %74 = vector.broadcast %c16_i32 : i32 to vector<1x128xi32>
    %75 = arith.cmpi slt, %13, %74 : vector<1x128xi32>
    %76 = arith.andi %73, %75 : vector<1x128xi1>
    %cst_24 = arith.constant 0.000000e+00 : f32
    %77 = vector.broadcast %cst_24 : f32 to vector<2x128xf32>
    %78 = arith.maximumf %12, %77 : vector<2x128xf32>
    %79 = math.absf %12 : vector<2x128xf32>
    %cst_25 = arith.constant 0.000000e+00 : f32
    %80 = vector.broadcast %cst_25 : f32 to vector<2x128xf32>
    %81 = arith.subf %80, %79 : vector<2x128xf32>
    %82 = math.exp %81 : vector<2x128xf32>
    %83 = math.log1p %82 : vector<2x128xf32>
    %84 = arith.addf %78, %83 : vector<2x128xf32>
    %cst_26 = arith.constant 9.99999974E-6 : f32
    %85 = vector.broadcast %cst_26 : f32 to vector<2x128xf32>
    %86 = arith.addf %84, %85 : vector<2x128xf32>
    %87 = vector.shape_cast %76 : vector<1x128xi1> to vector<1x128xi1>
    %88 = vector.broadcast %87 : vector<1x128xi1> to vector<2x128xi1>
    %89 = arith.select %88, %86, %71 : vector<2x128xi1>, vector<2x128xf32>
    %c0_27 = arith.constant 0 : index
    %c0_28 = arith.constant 0 : index
    %90 = vector.load %arg6[%c0_27, %c0_28] : memref<2x128xf32, #tpu.memory_space<vmem>>, vector<2x128xf32>
    tpu.vector_store %arg6[%c0_27, %c0_28], %89 {strides = array<i32>} : memref<2x128xf32, #tpu.memory_space<vmem>>, vector<2x128xf32>,
    return
  }
  func.func @transform_0(%arg0: i32) -> (i32, i32) {
    %c0_i32 = arith.constant 0 : i32
    %c0_i32_0 = arith.constant 0 : i32
    return %arg0, %c0_i32 : i32, i32
  }
  func.func @transform_1(%arg0: i32) -> (i32, i32) {
    %c0_i32 = arith.constant 0 : i32
    %c0_i32_0 = arith.constant 0 : i32
    %c0_i32_1 = arith.constant 0 : i32
    return %c0_i32, %c0_i32_0 : i32, i32
  }
  func.func @transform_2(%arg0: i32) -> (i32, i32) {
    %c0_i32 = arith.constant 0 : i32
    %c0_i32_0 = arith.constant 0 : i32
    %c0_i32_1 = arith.constant 0 : i32
    return %c0_i32, %c0_i32_0 : i32, i32
  }
  func.func @transform_3(%arg0: i32) -> (i32, i32) {
    %c0_i32 = arith.constant 0 : i32
    %c0_i32_0 = arith.constant 0 : i32
    %c0_i32_1 = arith.constant 0 : i32
    return %c0_i32, %c0_i32_0 : i32, i32
  }
  func.func @transform_4(%arg0: i32) -> (i32, i32) {
    %c0_i32 = arith.constant 0 : i32
    %c0_i32_0 = arith.constant 0 : i32
    %c0_i32_1 = arith.constant 0 : i32
    return %c0_i32, %c0_i32_0 : i32, i32
  }
  func.func @transform_5(%arg0: i32) -> (i32, i32) {
    %c0_i32 = arith.constant 0 : i32
    %c0_i32_0 = arith.constant 0 : i32
    return %arg0, %c0_i32 : i32, i32
  }
}

module attributes {stable_mosaic.version = 11 : i64} {
  func.func @kernel(%arg0: i32, %arg1: memref<2x16xf32, #tpu.memory_space<vmem>>, %arg2: memref<16x32xf32, #tpu.memory_space<vmem>>, %arg3: memref<1x32xf32, #tpu.memory_space<vmem>>, %arg4: memref<32x128xf32, #tpu.memory_space<vmem>>, %arg5: memref<1x128xf32, #tpu.memory_space<vmem>>, %arg6: memref<2x128xf32, #tpu.memory_space<vmem>>) attributes {dimension_semantics = [#tpu.dimension_semantics<parallel>], iteration_bounds = array<i64: 1>, scalar_prefetch = 0 : i64, scratch_operands = 0 : i64, tpu.core_type = #tpu.core_type<tc>, window_params = [{transform_indices = @transform_0, window_bounds = array<i64: 2, 16>}, {pipeline_mode = #tpu.pipeline_mode<synchronous>, transform_indices = @transform_1, window_bounds = array<i64: 16, 32>}, {pipeline_mode = #tpu.pipeline_mode<synchronous>, transform_indices = @transform_2, window_bounds = array<i64: 1, 32>}, {pipeline_mode = #tpu.pipeline_mode<synchronous>, transform_indices = @transform_3, window_bounds = array<i64: 32, 128>}, {pipeline_mode = #tpu.pipeline_mode<synchronous>, transform_indices = @transform_4, window_bounds = array<i64: 1, 128>}, {transform_indices = @transform_5, window_bounds = array<i64: 2, 128>}]} {
    %c0 = arith.constant 0 : index
    %c0_0 = arith.constant 0 : index
    %0 = vector.load %arg1[%c0, %c0_0] : memref<2x16xf32, #tpu.memory_space<vmem>>, vector<2x16xf32>
    %c0_1 = arith.constant 0 : index
    %c0_2 = arith.constant 0 : index
    %1 = vector.load %arg2[%c0_1, %c0_2] : memref<16x32xf32, #tpu.memory_space<vmem>>, vector<16x32xf32>
    %cst = arith.constant dense<0.000000e+00> : vector<2x32xf32>
    %2 = tpu.matmul %0, %1, %cst {dimension_numbers = #tpu.dot_dimension_numbers<[1], [0], [0], [1], [0, 0, 1, 1], [], []>} : vector<2x16xf32>, vector<16x32xf32>, vector<2x32xf32> -> vector<2x32xf32>
    %c0_3 = arith.constant 0 : index
    %c0_4 = arith.constant 0 : index
    %3 = vector.load %arg3[%c0_3, %c0_4] : memref<1x32xf32, #tpu.memory_space<vmem>>, vector<1x32xf32>
    %4 = vector.broadcast %3 : vector<1x32xf32> to vector<2x32xf32>
    %5 = arith.addf %2, %4 : vector<2x32xf32>
    %cst_5 = arith.constant 0.000000e+00 : f32
    %6 = vector.broadcast %cst_5 : f32 to vector<2x32xf32>
    %7 = arith.maximumf %5, %6 : vector<2x32xf32>
    %c0_6 = arith.constant 0 : index
    %c0_7 = arith.constant 0 : index
    %8 = vector.load %arg4[%c0_6, %c0_7] : memref<32x128xf32, #tpu.memory_space<vmem>>, vector<32x128xf32>
    %cst_8 = arith.constant dense<0.000000e+00> : vector<2x128xf32>
    %9 = tpu.matmul %7, %8, %cst_8 {dimension_numbers = #tpu.dot_dimension_numbers<[1], [0], [0], [1], [0, 0, 1, 1], [], []>} : vector<2x32xf32>, vector<32x128xf32>, vector<2x128xf32> -> vector<2x128xf32>
    %c0_9 = arith.constant 0 : index
    %c0_10 = arith.constant 0 : index
    %10 = vector.load %arg5[%c0_9, %c0_10] : memref<1x128xf32, #tpu.memory_space<vmem>>, vector<1x128xf32>
    %11 = vector.broadcast %10 : vector<1x128xf32> to vector<2x128xf32>
    %12 = arith.addf %9, %11 : vector<2x128xf32>
    %13 = tpu.iota {dimensions = array<i32: 1>} : vector<1x128xi32>
    %cst_11 = arith.constant 0.000000e+00 : f32
    %14 = vector.broadcast %cst_11 : f32 to vector<2x128xf32>
    %c0_i32 = arith.constant 0 : i32
    %15 = vector.broadcast %c0_i32 : i32 to vector<1x128xi32>
    %16 = arith.cmpi sge, %13, %15 : vector<1x128xi32>
    %c3_i32 = arith.constant 3 : i32
    %17 = vector.broadcast %c3_i32 : i32 to vector<1x128xi32>
    %18 = arith.cmpi slt, %13, %17 : vector<1x128xi32>
    %19 = arith.andi %16, %18 : vector<1x128xi1>
    %cst_12 = arith.constant 0xFF800000 : f32
    %20 = vector.shape_cast %19 : vector<1x128xi1> to vector<1x128xi1>
    %21 = vector.broadcast %20 : vector<1x128xi1> to vector<2x128xi1>
    %22 = vector.broadcast %cst_12 : f32 to vector<2x128xf32>
    %23 = arith.select %21, %12, %22 : vector<2x128xi1>, vector<2x128xf32>
    %cst_13 = arith.constant dense<0xFF800000> : vector<2xf32>
    %24 = vector.multi_reduction <maximumf>, %23, %cst_13 [1] : vector<2x128xf32> to vector<2xf32>
    %25 = vector.shape_cast %24 : vector<2xf32> to vector<2x1xf32>
    %26 = vector.broadcast %25 : vector<2x1xf32> to vector<2x128xf32>
    %27 = arith.subf %23, %26 : vector<2x128xf32>
    %28 = math.exp %27 : vector<2x128xf32>
    %cst_14 = arith.constant dense<0.000000e+00> : vector<2xf32>
    %29 = vector.multi_reduction <add>, %28, %cst_14 [1] : vector<2x128xf32> to vector<2xf32>
    %30 = vector.shape_cast %29 : vector<2xf32> to vector<2x1xf32>
    %31 = vector.broadcast %30 : vector<2x1xf32> to vector<2x128xf32>
    %32 = arith.divf %28, %31 : vector<2x128xf32>
    %33 = vector.shape_cast %19 : vector<1x128xi1> to vector<1x128xi1>
    %34 = vector.broadcast %33 : vector<1x128xi1> to vector<2x128xi1>
    %35 = arith.select %34, %32, %14 : vector<2x128xi1>, vector<2x128xf32>
    %c3_i32_15 = arith.constant 3 : i32
    %36 = vector.broadcast %c3_i32_15 : i32 to vector<1x128xi32>
    %37 = arith.cmpi sge, %13, %36 : vector<1x128xi32>
    %c8_i32 = arith.constant 8 : i32
    %38 = vector.broadcast %c8_i32 : i32 to vector<1x128xi32>
    %39 = arith.cmpi slt, %13, %38 : vector<1x128xi32>
    %40 = arith.andi %37, %39 : vector<1x128xi1>
    %cst_16 = arith.constant 0xFF800000 : f32
    %41 = vector.shape_cast %40 : vector<1x128xi1> to vector<1x128xi1>
    %42 = vector.broadcast %41 : vector<1x128xi1> to vector<2x128xi1>
    %43 = vector.broadcast %cst_16 : f32 to vector<2x128xf32>
    %44 = arith.select %42, %12, %43 : vector<2x128xi1>, vector<2x128xf32>
    %cst_17 = arith.constant dense<0xFF800000> : vector<2xf32>
    %45 = vector.multi_reduction <maximumf>, %44, %cst_17 [1] : vector<2x128xf32> to vector<2xf32>
    %46 = vector.shape_cast %45 : vector<2xf32> to vector<2x1xf32>
    %47 = vector.broadcast %46 : vector<2x1xf32> to vector<2x128xf32>
    %48 = arith.subf %44, %47 : vector<2x128xf32>
    %49 = math.exp %48 : vector<2x128xf32>
    %cst_18 = arith.constant dense<0.000000e+00> : vector<2xf32>
    %50 = vector.multi_reduction <add>, %49, %cst_18 [1] : vector<2x128xf32> to vector<2xf32>
    %51 = vector.shape_cast %50 : vector<2xf32> to vector<2x1xf32>
    %52 = vector.broadcast %51 : vector<2x1xf32> to vector<2x128xf32>
    %53 = arith.divf %49, %52 : vector<2x128xf32>
    %54 = vector.shape_cast %40 : vector<1x128xi1> to vector<1x128xi1>
    %55 = vector.broadcast %54 : vector<1x128xi1> to vector<2x128xi1>
    %56 = arith.select %55, %53, %35 : vector<2x128xi1>, vector<2x128xf32>
    %c8_i32_19 = arith.constant 8 : i32
    %57 = vector.broadcast %c8_i32_19 : i32 to vector<1x128xi32>
    %58 = arith.cmpi sge, %13, %57 : vector<1x128xi32>
    %c12_i32 = arith.constant 12 : i32
    %59 = vector.broadcast %c12_i32 : i32 to vector<1x128xi32>
    %60 = arith.cmpi slt, %13, %59 : vector<1x128xi32>
    %61 = arith.andi %58, %60 : vector<1x128xi1>
    %cst_20 = arith.constant 0.000000e+00 : f32
    %62 = vector.broadcast %cst_20 : f32 to vector<2x128xf32>
    %63 = arith.subf %62, %12 : vector<2x128xf32>
    %64 = math.exp %63 : vector<2x128xf32>
    %cst_21 = arith.constant 1.000000e+00 : f32
    %65 = vector.broadcast %cst_21 : f32 to vector<2x128xf32>
    %66 = arith.addf %65, %64 : vector<2x128xf32>
    %cst_22 = arith.constant 1.000000e+00 : f32
    %67 = vector.broadcast %cst_22 : f32 to vector<2x128xf32>
    %68 = arith.divf %67, %66 : vector<2x128xf32>
    %69 = vector.shape_cast %61 : vector<1x128xi1> to vector<1x128xi1>
    %70 = vector.broadcast %69 : vector<1x128xi1> to vector<2x128xi1>
    %71 = arith.select %70, %68, %56 : vector<2x128xi1>, vector<2x128xf32>
    %c12_i32_23 = arith.constant 12 : i32
    %72 = vector.broadcast %c12_i32_23 : i32 to vector<1x128xi32>
    %73 = arith.cmpi sge, %13, %72 : vector<1x128xi32>
    %c16_i32 = arith.constant 16 : i32
    %74 = vector.broadcast %c16_i32 : i32 to vector<1x128xi32>
    %75 = arith.cmpi slt, %13, %74 : vector<1x128xi32>
    %76 = arith.andi %73, %75 : vector<1x128xi1>
    %cst_24 = arith.constant 0.000000e+00 : f32
    %77 = vector.broadcast %cst_24 : f32 to vector<2x128xf32>
    %78 = arith.maximumf %12, %77 : vector<2x128xf32>
    %79 = math.absf %12 : vector<2x128xf32>
    %cst_25 = arith.constant 0.000000e+00 : f32
    %80 = vector.broadcast %cst_25 : f32 to vector<2x128xf32>
    %81 = arith.subf %80, %79 : vector<2x128xf32>
    %82 = math.exp %81 : vector<2x128xf32>
    %83 = math.log1p %82 : vector<2x128xf32>
    %84 = arith.addf %78, %83 : vector<2x128xf32>
    %cst_26 = arith.constant 9.99999974E-6 : f32
    %85 = vector.broadcast %cst_26 : f32 to vector<2x128xf32>
    %86 = arith.addf %84, %85 : vector<2x128xf32>
    %87 = vector.shape_cast %76 : vector<1x128xi1> to vector<1x128xi1>
    %88 = vector.broadcast %87 : vector<1x128xi1> to vector<2x128xi1>
    %89 = arith.select %88, %86, %71 : vector<2x128xi1>, vector<2x128xf32>
    %c0_27 = arith.constant 0 : index
    %c0_28 = arith.constant 0 : index
    %90 = vector.load %arg6[%c0_27, %c0_28] : memref<2x128xf32, #tpu.memory_space<vmem>>, vector<2x128xf32>
    tpu.vector_store %arg6[%c0_27, %c0_28], %89 {strides = array<i32>} : memref<2x128xf32, #tpu.memory_space<vmem>>, vector<2x128xf32>,
    return
  }
  func.func @transform_0(%arg0: i32) -> (i32, i32) {
    %c0_i32 = arith.constant 0 : i32
    %c0_i32_0 = arith.constant 0 : i32
    return %arg0, %c0_i32 : i32, i32
  }
  func.func @transform_1(%arg0: i32) -> (i32, i32) {
    %c0_i32 = arith.constant 0 : i32
    %c0_i32_0 = arith.constant 0 : i32
    %c0_i32_1 = arith.constant 0 : i32
    return %c0_i32, %c0_i32_0 : i32, i32
  }
  func.func @transform_2(%arg0: i32) -> (i32, i32) {
    %c0_i32 = arith.constant 0 : i32
    %c0_i32_0 = arith.constant 0 : i32
    %c0_i32_1 = arith.constant 0 : i32
    return %c0_i32, %c0_i32_0 : i32, i32
  }
  func.func @transform_3(%arg0: i32) -> (i32, i32) {
    %c0_i32 = arith.constant 0 : i32
    %c0_i32_0 = arith.constant 0 : i32
    %c0_i32_1 = arith.constant 0 : i32
    return %c0_i32, %c0_i32_0 : i32, i32
  }
  func.func @transform_4(%arg0: i32) -> (i32, i32) {
    %c0_i32 = arith.constant 0 : i32
    %c0_i32_0 = arith.constant 0 : i32
    %c0_i32_1 = arith.constant 0 : i32
    return %c0_i32, %c0_i32_0 : i32, i32
  }
  func.func @transform_5(%arg0: i32) -> (i32, i32) {
    %c0_i32 = arith.constant 0 : i32
    %c0_i32_0 = arith.constant 0 : i32
    return %arg0, %c0_i32 : i32, i32
  }
}

</mosaic_0001>

<llo_original>
// kernel: mixed_policy_net_forward.1
$region0: #{mixed_policy_net_forward.1}
  #allocation0 [shape = 'u32[]', space=smem, size = 0x4, offset = 0x4, fixed_abs, tag = 'smem constant byte address 0x4 - core index']
  #allocation1 [shape = 'u32[144,128]{1,0:T(1,128)}', space=vmem, size = 0x12000, scoped, tag = 'internal scratch']
  %s0 = inlined_call_operand.vmem [shape: f32[2,16], index: 0, kind: input, shape index: {}]
  %s1 = inlined_call_operand.hbm [shape: f32[16,32], index: 1, kind: input, shape index: {}]
  %s2 = inlined_call_operand.hbm [shape: f32[1,32], index: 2, kind: input, shape index: {}]
  %s3 = inlined_call_operand.hbm [shape: f32[32,128], index: 3, kind: input, shape index: {}]
  %s4 = inlined_call_operand.vmem [shape: f32[1,128], index: 4, kind: input, shape index: {}]
  %s5 = inlined_call_operand.vmem [shape: f32[2,128], index: 5, kind: output, shape index: {}]
  %s6 = sld [smem:[#allocation0]]
  $region42: #{mixed_policy_net_forward.1} parent=0
    _
  %s8 = ssub.s32 1, %s6
  %s9 = scalar_select 0, %s8, %s6
  $region1: #{mixed_policy_net_forward.1} parent=0
    #allocation2 [shape = 'u8[8192]{0}', space=vmem, size = 0x2000, scoped, tag = 'input window, operand 1, single buffered']
    #allocation3 [shape = 's32[1]{0}', space=sflag, size = 0x4, scoped, tag = 'scoped memory for mixed_policy_net_forward.1']
    #allocation4 [shape = 'u8[512]{0}', space=vmem, size = 0x400, scoped, tag = 'input window, operand 2, single buffered']
    #allocation5 [shape = 's32[1]{0}', space=sflag, size = 0x4, scoped, tag = 'scoped memory for mixed_policy_net_forward.1']
    #allocation6 [shape = 'u8[16384]{0}', space=vmem, size = 0x4000, scoped, tag = 'input window, operand 3, single buffered']
    %10 = vsyncpa [#allocation3], 0
    %11 = vsyncpa [#allocation5], 0
    // Predicated region
    $region2: #{mixed_policy_net_forward.1} parent=1 // pred_check
      _
    $region3: #{mixed_policy_net_forward.1} parent=1 // pred_check_branch
      %13 = sbr.rel (0) target = $region5
    $region4: #{mixed_policy_net_forward.1} parent=1 // pred_region
      _
    $region5: #{mixed_policy_net_forward.1} parent=1 // pred_fallthru
      _
    // Predicated region
    $region6: #{mixed_policy_net_forward.1} parent=1 // pred_check
      _
    $region7: #{mixed_policy_net_forward.1} parent=1 // pred_check_branch
      %15 = sbr.rel (0) target = $region9
    $region8: #{mixed_policy_net_forward.1} parent=1 // pred_region
      %s17 = ssub.s32 256, 256
      %18 = vsyncadd [#allocation3], %s17
      %s19 = sshll.u32 [#allocation2], 4
      %s20 = int_to_ptr.vmem [resolvable:$true] %s19
      %25 = dma.hbm_to_vmem [thread:$0]  %s1, 256, %s20, [#allocation3], 128, 128, 8
    $region9: #{mixed_policy_net_forward.1} parent=1 // pred_fallthru
      _
    // Predicated region
    $region10: #{mixed_policy_net_forward.1} parent=1 // pred_check
      _
    $region11: #{mixed_policy_net_forward.1} parent=1 // pred_check_branch
      %27 = sbr.rel (0) target = $region13
    $region12: #{mixed_policy_net_forward.1} parent=1 // pred_region
      %s29 = ssub.s32 16, 16
      %30 = vsyncadd [#allocation5], %s29
      %s32 = sshll.u32 [#allocation4], 4
      %s33 = int_to_ptr.vmem [resolvable:$true] %s32
      %35 = dma.hbm_to_vmem [thread:$0]  %s2, 16, %s33, [#allocation5]
    $region13: #{mixed_policy_net_forward.1} parent=1 // pred_fallthru
      _
    // Predicated region
    $region14: #{mixed_policy_net_forward.1} parent=1 // pred_check
      _
    $region15: #{mixed_policy_net_forward.1} parent=1 // pred_check_branch
      %37 = sbr.rel (0) target = $region17
    $region16: #{mixed_policy_net_forward.1} parent=1 // pred_region
      %s39 = ssub.s32 512, 512
      %40 = vsyncadd [#allocation5], %s39
      %s41 = sshll.u32 [#allocation6], 4
      %s42 = int_to_ptr.vmem [resolvable:$true] %s41
      %47 = dma.hbm_to_vmem [thread:$0]  %s3, 512, %s42, [#allocation5], 128, 128, 8
    $region17: #{mixed_policy_net_forward.1} parent=1 // pred_fallthru
      _
    // Predicated region
    $region18: #{mixed_policy_net_forward.1} parent=1 // pred_check
      _
    $region19: #{mixed_policy_net_forward.1} parent=1 // pred_check_branch
      %49 = sbr.rel (0) target = $region21
    $region20: #{mixed_policy_net_forward.1} parent=1 // pred_region
      _
    $region21: #{mixed_policy_net_forward.1} parent=1 // pred_fallthru
      _
    // Predicated region
    $region22: #{mixed_policy_net_forward.1} parent=1 // pred_check
      _
    $region23: #{mixed_policy_net_forward.1} parent=1 // pred_check_branch
      %51 = sbr.rel (0) target = $region25
    $region24: #{mixed_policy_net_forward.1} parent=1 // pred_region
      %52 = dma.done [#allocation3], 256
    $region25: #{mixed_policy_net_forward.1} parent=1 // pred_fallthru
      _
    // Predicated region
    $region26: #{mixed_policy_net_forward.1} parent=1 // pred_check
      _
    $region27: #{mixed_policy_net_forward.1} parent=1 // pred_check_branch
      %54 = sbr.rel (0) target = $region29
    $region28: #{mixed_policy_net_forward.1} parent=1 // pred_region
      %55 = dma.done [#allocation5], 16
    $region29: #{mixed_policy_net_forward.1} parent=1 // pred_fallthru
      _
    // Predicated region
    $region30: #{mixed_policy_net_forward.1} parent=1 // pred_check
      _
    $region31: #{mixed_policy_net_forward.1} parent=1 // pred_check_branch
      %57 = sbr.rel (0) target = $region33
    $region32: #{mixed_policy_net_forward.1} parent=1 // pred_region
      %58 = dma.done [#allocation5], 512
    $region33: #{mixed_policy_net_forward.1} parent=1 // pred_fallthru
      _
    %v59 = vld [vmem:[%s0] sm:$0x3]
    %v60 = vld [vmem:[#allocation2] sm:$0xff]
    %v61 = vld [vmem:[#allocation2 + $0x8] sm:$0xff]
    %v62 = vld [vmem:[#allocation4] sm:$0x1]
    %v64 = vlaneseq
    %v65 = vshrl.u32 %v64, 7
    %v66 = vsub.s32 0, %v65
    %v67 = vrot.slane %v62, %v66
    %vm69 = vcmask 130048
    %v71 = vsel %vm69, %v59, 0
    %73 = vmatprep.subr.mxu0 0.0
    %74 = vmatpush1.msra.mxu0 %v60
    %75 = vmatprep.subr.mxu0 0.0
    %76 = vmatpush1.msra.mxu0 %v61
    %77 = vmatprep.subr.mxu0 0.0
    %78 = vmatpush1.msra.mxu0 0.0
    %79 = vmatprep.subr.mxu0 0.0
    %80 = vmatpush1.msra.mxu0 0.0
    %81 = vmatprep.subr.mxu0 0.0
    %82 = vmatpush1.msra.mxu0 0.0
    %83 = vmatprep.subr.mxu0 0.0
    %84 = vmatpush1.msra.mxu0 0.0
    %85 = vmatprep.subr.mxu0 0.0
    %86 = vmatpush1.msra.mxu0 0.0
    %87 = vmatprep.subr.mxu0 0.0
    %88 = vmatpush1.msra.mxu0 0.0
    %89 = vmatprep.subr.mxu0 0.0
    %90 = vmatpush1.msra.mxu0 0.0
    %91 = vmatprep.subr.mxu0 0.0
    %92 = vmatpush1.msra.mxu0 0.0
    %93 = vmatprep.subr.mxu0 0.0
    %94 = vmatpush1.msra.mxu0 0.0
    %95 = vmatprep.subr.mxu0 0.0
    %96 = vmatpush1.msra.mxu0 0.0
    %97 = vmatprep.subr.mxu0 0.0
    %98 = vmatpush1.msra.mxu0 0.0
    %99 = vmatprep.subr.mxu0 0.0
    %100 = vmatpush1.msra.mxu0 0.0
    %101 = vmatprep.subr.mxu0 0.0
    %102 = vmatpush1.msra.mxu0 0.0
    %103 = vmatprep.subr.mxu0 0.0
    %104 = vmatpush1.msra.mxu0 0.0
    %105 = vmatprep.subr.mxu0 0.0
    %106 = vmatpush1.msra.mxu0 0.0
    %107 = vmatprep.subr.mxu0 0.0
    %108 = vmatpush1.msra.mxu0 0.0
    %109 = vmatprep.subr.mxu0 0.0
    %110 = vmatpush1.msra.mxu0 0.0
    %111 = vmatprep.subr.mxu0 0.0
    %112 = vmatpush1.msra.mxu0 0.0
    %113 = vmatprep.subr.mxu0 0.0
    %114 = vmatpush1.msra.mxu0 0.0
    %115 = vmatprep.subr.mxu0 0.0
    %116 = vmatpush1.msra.mxu0 0.0
    %117 = vmatprep.subr.mxu0 0.0
    %118 = vmatpush1.msra.mxu0 0.0
    %119 = vmatprep.subr.mxu0 0.0
    %120 = vmatpush1.msra.mxu0 0.0
    %121 = vmatprep.subr.mxu0 0.0
    %122 = vmatpush1.msra.mxu0 0.0
    %123 = vmatprep.subr.mxu0 0.0
    %124 = vmatpush1.msra.mxu0 0.0
    %125 = vmatprep.subr.mxu0 0.0
    %126 = vmatpush1.msra.mxu0 0.0
    %127 = vmatprep.subr.mxu0 0.0
    %128 = vmatpush1.msra.mxu0 0.0
    %129 = vmatprep.subr.mxu0 0.0
    %130 = vmatpush1.msra.mxu0 0.0
    %131 = vmatprep.subr.mxu0 0.0
    %132 = vmatpush1.msra.mxu0 0.0
    %133 = vmatprep.subr.mxu0 0.0
    %134 = vmatpush1.msra.mxu0 0.0
    %135 = vmatprep.subr.mxu0 0.0
    %136 = vmatpush1.msra.mxu0 0.0
    %137 = vmatprep.mubr.f32.mxu0 0.0
    %138 = vmatmul.mubr.f32.gmra.mrb[0].mxu0 %v71
    %v139 = vpop.f32.mrb[0].mxu0
    %v140 = vadd.f32 %v67, %v139
    %v141 = vpop.f32.mrb[0].mxu0
    %142 = vdwg.mxu0
    %v143 = vmax.f32 %v140, 0.0
    %v144 = vld [vmem:[#allocation6] sm:$0xff]
    %v145 = vld [vmem:[#allocation6 + $0x8] sm:$0xff]
    %v146 = vld [vmem:[#allocation6 + $0x10] sm:$0xff]
    %v147 = vld [vmem:[#allocation6 + $0x18] sm:$0xff]
    %v148 = vld [vmem:[%s4] sm:$0x1]
    %v150 = vlaneseq
    %v151 = vshrl.u32 %v150, 7
    %v152 = vsub.s32 0, %v151
    %v153 = vrot.slane %v148, %v152
    %vm155 = vcmask 261120
    %v157 = vsel %vm155, %v143, 0
    %159 = vmatprep.subr.mxu0 0.0
    %160 = vmatpush1.msra.mxu0 %v144
    %161 = vmatprep.subr.mxu0 0.0
    %162 = vmatpush1.msra.mxu0 %v145
    %163 = vmatprep.subr.mxu0 0.0
    %164 = vmatpush1.msra.mxu0 %v146
    %165 = vmatprep.subr.mxu0 0.0
    %166 = vmatpush1.msra.mxu0 %v147
    %167 = vmatprep.subr.mxu0 0.0
    %168 = vmatpush1.msra.mxu0 0.0
    %169 = vmatprep.subr.mxu0 0.0
    %170 = vmatpush1.msra.mxu0 0.0
    %171 = vmatprep.subr.mxu0 0.0
    %172 = vmatpush1.msra.mxu0 0.0
    %173 = vmatprep.subr.mxu0 0.0
    %174 = vmatpush1.msra.mxu0 0.0
    %175 = vmatprep.subr.mxu0 0.0
    %176 = vmatpush1.msra.mxu0 0.0
    %177 = vmatprep.subr.mxu0 0.0
    %178 = vmatpush1.msra.mxu0 0.0
    %179 = vmatprep.subr.mxu0 0.0
    %180 = vmatpush1.msra.mxu0 0.0
    %181 = vmatprep.subr.mxu0 0.0
    %182 = vmatpush1.msra.mxu0 0.0
    %183 = vmatprep.subr.mxu0 0.0
    %184 = vmatpush1.msra.mxu0 0.0
    %185 = vmatprep.subr.mxu0 0.0
    %186 = vmatpush1.msra.mxu0 0.0
    %187 = vmatprep.subr.mxu0 0.0
    %188 = vmatpush1.msra.mxu0 0.0
    %189 = vmatprep.subr.mxu0 0.0
    %190 = vmatpush1.msra.mxu0 0.0
    %191 = vmatprep.subr.mxu0 0.0
    %192 = vmatpush1.msra.mxu0 0.0
    %193 = vmatprep.subr.mxu0 0.0
    %194 = vmatpush1.msra.mxu0 0.0
    %195 = vmatprep.subr.mxu0 0.0
    %196 = vmatpush1.msra.mxu0 0.0
    %197 = vmatprep.subr.mxu0 0.0
    %198 = vmatpush1.msra.mxu0 0.0
    %199 = vmatprep.subr.mxu0 0.0
    %200 = vmatpush1.msra.mxu0 0.0
    %201 = vmatprep.subr.mxu0 0.0
    %202 = vmatpush1.msra.mxu0 0.0
    %203 = vmatprep.subr.mxu0 0.0
    %204 = vmatpush1.msra.mxu0 0.0
    %205 = vmatprep.subr.mxu0 0.0
    %206 = vmatpush1.msra.mxu0 0.0
    %207 = vmatprep.subr.mxu0 0.0
    %208 = vmatpush1.msra.mxu0 0.0
    %209 = vmatprep.subr.mxu0 0.0
    %210 = vmatpush1.msra.mxu0 0.0
    %211 = vmatprep.subr.mxu0 0.0
    %212 = vmatpush1.msra.mxu0 0.0
    %213 = vmatprep.subr.mxu0 0.0
    %214 = vmatpush1.msra.mxu0 0.0
    %215 = vmatprep.subr.mxu0 0.0
    %216 = vmatpush1.msra.mxu0 0.0
    %217 = vmatprep.subr.mxu0 0.0
    %218 = vmatpush1.msra.mxu0 0.0
    %219 = vmatprep.subr.mxu0 0.0
    %220 = vmatpush1.msra.mxu0 0.0
    %221 = vmatprep.subr.mxu0 0.0
    %222 = vmatpush1.msra.mxu0 0.0
    %223 = vmatprep.mubr.f32.mxu0 0.0
    %224 = vmatmul.mubr.f32.gmra.mrb[0].mxu0 %v157
    %v225 = vpop.f32.mrb[0].mxu0
    %v226 = vadd.f32 %v153, %v225
    %v227 = vpop.f32.mrb[0].mxu0
    %228 = vdwg.mxu0
    %v229 = vlaneseq
    %v230 = vand.u32 %v229, 127
    %vm231 = vcmp.ge.s32.totalorder %v230, 0
    %vm232 = vcmp.lt.s32.totalorder %v230, 3
    %vm233 = vmand %vm231, %vm232
    %v234 = vsel %vm233, 1, 0
    %vm235 = vcmp.eq.s32.totalorder %v234, 1
    %v236 = vsel %vm235, %v226, -inf
    %vm237 = vcmask 1041408
    %v238 = vsel %vm237, %v236, -inf
    %239 = vmax.xlane.f32.xlu0 %v238
    %v240 = vpop.xlane.xlu0 %239
    %v241 = vsub.f32 %v236, %v240
    %v242 = vmul.f32 %v241, 1.442695
    %v243 = vpow.pop %v242
    %v244 = vsel %vm237, %v243, 0.0
    %245 = vadd.xlane.f32.xlu0 %v244
    %v246 = vpop.xlane.xlu0 %245
    %v247 = vrcp.pop %v246
    %v248 = vmul.f32 %v243, %v247
    %v249 = vsel %vm235, %v248, 0.0
    %vm250 = vcmp.ge.s32.totalorder %v230, 3
    %vm251 = vcmp.lt.s32.totalorder %v230, 8
    %vm252 = vmand %vm250, %vm251
    %v253 = vsel %vm252, 1, 0
    %vm254 = vcmp.eq.s32.totalorder %v253, 1
    %v255 = vsel %vm254, %v226, -inf
    %v256 = vsel %vm237, %v255, -inf
    %257 = vmax.xlane.f32.xlu0 %v256
    %v258 = vpop.xlane.xlu0 %257
    %v259 = vsub.f32 %v255, %v258
    %v260 = vmul.f32 %v259, 1.442695
    %v261 = vpow.pop %v260
    %v262 = vsel %vm237, %v261, 0.0
    %263 = vadd.xlane.f32.xlu0 %v262
    %v264 = vpop.xlane.xlu0 %263
    %v265 = vrcp.pop %v264
    %v266 = vmul.f32 %v261, %v265
    %v267 = vsel %vm254, %v266, %v249
    %vm268 = vcmp.ge.s32.totalorder %v230, 8
    %vm269 = vcmp.lt.s32.totalorder %v230, 12
    %vm270 = vmand %vm268, %vm269
    %v271 = vsub.f32 0.0, %v226
    %v272 = vmul.f32 %v271, 1.442695
    %v273 = vpow.pop %v272
    %v274 = vadd.f32 %v273, 1.0
    %v275 = vrcp.pop %v274
    %v276 = vmul.f32 1.0, %v275
    %v277 = vsel %vm270, 1, 0
    %vm278 = vcmp.eq.s32.totalorder %v277, 1
    %v279 = vsel %vm278, %v276, %v267
    %vm280 = vcmp.ge.s32.totalorder %v230, 12
    %vm281 = vcmp.lt.s32.totalorder %v230, 16
    %vm282 = vmand %vm280, %vm281
    %v283 = vmax.f32 %v226, 0.0
    %v284 = vand.u32 2147483647, %v226
    %v285 = vsub.f32 0.0, %v284
    %v286 = vmul.f32 %v285, 1.442695
    %v287 = vpow.pop %v286
    %v288 = vadd.f32 %v287, 1.0
    %v289 = vlog2.pop %v288
    %v290 = vmul.f32 %v289, 0.6931472
    %v291 = vmul.f32 -0.5, %v287
    %v292 = vadd.f32 %v291, 1.0
    %v293 = vmul.f32 %v292, %v287
    %v294 = vand.u32 2147483647, %v287
    %vm295 = vcmp.lt.f32.partialorder %v294, 0.0004427343
    %v296 = vsel %vm295, %v293, %v290
    %v297 = vadd.f32 %v283, %v296
    %v298 = vadd.f32 %v297, 1e-05
    %v299 = vsel %vm282, 1, 0
    %vm300 = vcmp.eq.s32.totalorder %v299, 1
    %v301 = vsel %vm300, %v298, %v279
    %302 = vst [vmem:[%s5] sm:$0x3] %v301
    // Predicated region
    $region34: #{mixed_policy_net_forward.1} parent=1 // pred_check
      _
    $region35: #{mixed_policy_net_forward.1} parent=1 // pred_check_branch
      %304 = sbr.rel (0) target = $region37
    $region36: #{mixed_policy_net_forward.1} parent=1 // pred_region
      _
    $region37: #{mixed_policy_net_forward.1} parent=1 // pred_fallthru
      _
    // Predicated region
    $region38: #{mixed_policy_net_forward.1} parent=1 // pred_check
      _
    $region39: #{mixed_policy_net_forward.1} parent=1 // pred_check_branch
      %306 = sbr.rel (0) target = $region41
    $region40: #{mixed_policy_net_forward.1} parent=1 // pred_region
      _
    $region41: #{mixed_policy_net_forward.1} parent=1 // pred_fallthru
      _
    %307 = vsyncpa [#allocation3], 1
    %308 = vsyncpa [#allocation5], 1

// kernel: mixed_policy_net_forward.1
$region0: #{mixed_policy_net_forward.1}
  #allocation0 [shape = 'u32[]', space=smem, size = 0x4, offset = 0x4, fixed_abs, tag = 'smem constant byte address 0x4 - core index']
  #allocation1 [shape = 'u32[144,128]{1,0:T(1,128)}', space=vmem, size = 0x12000, scoped, tag = 'internal scratch']
  %s0 = inlined_call_operand.vmem [shape: f32[2,16], index: 0, kind: input, shape index: {}]
  %s1 = inlined_call_operand.hbm [shape: f32[16,32], index: 1, kind: input, shape index: {}]
  %s2 = inlined_call_operand.hbm [shape: f32[1,32], index: 2, kind: input, shape index: {}]
  %s3 = inlined_call_operand.hbm [shape: f32[32,128], index: 3, kind: input, shape index: {}]
  %s4 = inlined_call_operand.vmem [shape: f32[1,128], index: 4, kind: input, shape index: {}]
  %s5 = inlined_call_operand.vmem [shape: f32[2,128], index: 5, kind: output, shape index: {}]
  %s6 = sld [smem:[#allocation0]]
  $region42: #{mixed_policy_net_forward.1} parent=0
    _
  %s8 = ssub.s32 1, %s6
  %s9 = scalar_select 0, %s8, %s6
  $region1: #{mixed_policy_net_forward.1} parent=0
    #allocation2 [shape = 'u8[8192]{0}', space=vmem, size = 0x2000, scoped, tag = 'input window, operand 1, single buffered']
    #allocation3 [shape = 's32[1]{0}', space=sflag, size = 0x4, scoped, tag = 'scoped memory for mixed_policy_net_forward.1']
    #allocation4 [shape = 'u8[512]{0}', space=vmem, size = 0x400, scoped, tag = 'input window, operand 2, single buffered']
    #allocation5 [shape = 's32[1]{0}', space=sflag, size = 0x4, scoped, tag = 'scoped memory for mixed_policy_net_forward.1']
    #allocation6 [shape = 'u8[16384]{0}', space=vmem, size = 0x4000, scoped, tag = 'input window, operand 3, single buffered']
    %10 = vsyncpa [#allocation3], 0
    %11 = vsyncpa [#allocation5], 0
    // Predicated region
    $region2: #{mixed_policy_net_forward.1} parent=1 // pred_check
      _
    $region3: #{mixed_policy_net_forward.1} parent=1 // pred_check_branch
      %13 = sbr.rel (0) target = $region5
    $region4: #{mixed_policy_net_forward.1} parent=1 // pred_region
      _
    $region5: #{mixed_policy_net_forward.1} parent=1 // pred_fallthru
      _
    // Predicated region
    $region6: #{mixed_policy_net_forward.1} parent=1 // pred_check
      _
    $region7: #{mixed_policy_net_forward.1} parent=1 // pred_check_branch
      %15 = sbr.rel (0) target = $region9
    $region8: #{mixed_policy_net_forward.1} parent=1 // pred_region
      %s17 = ssub.s32 256, 256
      %18 = vsyncadd [#allocation3], %s17
      %s19 = sshll.u32 [#allocation2], 4
      %s20 = int_to_ptr.vmem [resolvable:$true] %s19
      %25 = dma.hbm_to_vmem [thread:$0]  %s1, 256, %s20, [#allocation3], 128, 128, 8
    $region9: #{mixed_policy_net_forward.1} parent=1 // pred_fallthru
      _
    // Predicated region
    $region10: #{mixed_policy_net_forward.1} parent=1 // pred_check
      _
    $region11: #{mixed_policy_net_forward.1} parent=1 // pred_check_branch
      %27 = sbr.rel (0) target = $region13
    $region12: #{mixed_policy_net_forward.1} parent=1 // pred_region
      %s29 = ssub.s32 16, 16
      %30 = vsyncadd [#allocation5], %s29
      %s32 = sshll.u32 [#allocation4], 4
      %s33 = int_to_ptr.vmem [resolvable:$true] %s32
      %35 = dma.hbm_to_vmem [thread:$0]  %s2, 16, %s33, [#allocation5]
    $region13: #{mixed_policy_net_forward.1} parent=1 // pred_fallthru
      _
    // Predicated region
    $region14: #{mixed_policy_net_forward.1} parent=1 // pred_check
      _
    $region15: #{mixed_policy_net_forward.1} parent=1 // pred_check_branch
      %37 = sbr.rel (0) target = $region17
    $region16: #{mixed_policy_net_forward.1} parent=1 // pred_region
      %s39 = ssub.s32 512, 512
      %40 = vsyncadd [#allocation5], %s39
      %s41 = sshll.u32 [#allocation6], 4
      %s42 = int_to_ptr.vmem [resolvable:$true] %s41
      %47 = dma.hbm_to_vmem [thread:$0]  %s3, 512, %s42, [#allocation5], 128, 128, 8
    $region17: #{mixed_policy_net_forward.1} parent=1 // pred_fallthru
      _
    // Predicated region
    $region18: #{mixed_policy_net_forward.1} parent=1 // pred_check
      _
    $region19: #{mixed_policy_net_forward.1} parent=1 // pred_check_branch
      %49 = sbr.rel (0) target = $region21
    $region20: #{mixed_policy_net_forward.1} parent=1 // pred_region
      _
    $region21: #{mixed_policy_net_forward.1} parent=1 // pred_fallthru
      _
    // Predicated region
    $region22: #{mixed_policy_net_forward.1} parent=1 // pred_check
      _
    $region23: #{mixed_policy_net_forward.1} parent=1 // pred_check_branch
      %51 = sbr.rel (0) target = $region25
    $region24: #{mixed_policy_net_forward.1} parent=1 // pred_region
      %52 = dma.done [#allocation3], 256
    $region25: #{mixed_policy_net_forward.1} parent=1 // pred_fallthru
      _
    // Predicated region
    $region26: #{mixed_policy_net_forward.1} parent=1 // pred_check
      _
    $region27: #{mixed_policy_net_forward.1} parent=1 // pred_check_branch
      %54 = sbr.rel (0) target = $region29
    $region28: #{mixed_policy_net_forward.1} parent=1 // pred_region
      %55 = dma.done [#allocation5], 16
    $region29: #{mixed_policy_net_forward.1} parent=1 // pred_fallthru
      _
    // Predicated region
    $region30: #{mixed_policy_net_forward.1} parent=1 // pred_check
      _
    $region31: #{mixed_policy_net_forward.1} parent=1 // pred_check_branch
      %57 = sbr.rel (0) target = $region33
    $region32: #{mixed_policy_net_forward.1} parent=1 // pred_region
      %58 = dma.done [#allocation5], 512
    $region33: #{mixed_policy_net_forward.1} parent=1 // pred_fallthru
      _
    %v59 = vld [vmem:[%s0] sm:$0x3]
    %v60 = vld [vmem:[#allocation2] sm:$0xff]
    %v61 = vld [vmem:[#allocation2 + $0x8] sm:$0xff]
    %v62 = vld [vmem:[#allocation4] sm:$0x1]
    %v64 = vlaneseq
    %v65 = vshrl.u32 %v64, 7
    %v66 = vsub.s32 0, %v65
    %v67 = vrot.slane %v62, %v66
    %vm69 = vcmask 130048
    %v71 = vsel %vm69, %v59, 0
    %73 = vmatprep.subr.mxu0 0.0
    %74 = vmatpush1.msra.mxu0 %v60
    %75 = vmatprep.subr.mxu0 0.0
    %76 = vmatpush1.msra.mxu0 %v61
    %77 = vmatprep.subr.mxu0 0.0
    %78 = vmatpush1.msra.mxu0 0.0
    %79 = vmatprep.subr.mxu0 0.0
    %80 = vmatpush1.msra.mxu0 0.0
    %81 = vmatprep.subr.mxu0 0.0
    %82 = vmatpush1.msra.mxu0 0.0
    %83 = vmatprep.subr.mxu0 0.0
    %84 = vmatpush1.msra.mxu0 0.0
    %85 = vmatprep.subr.mxu0 0.0
    %86 = vmatpush1.msra.mxu0 0.0
    %87 = vmatprep.subr.mxu0 0.0
    %88 = vmatpush1.msra.mxu0 0.0
    %89 = vmatprep.subr.mxu0 0.0
    %90 = vmatpush1.msra.mxu0 0.0
    %91 = vmatprep.subr.mxu0 0.0
    %92 = vmatpush1.msra.mxu0 0.0
    %93 = vmatprep.subr.mxu0 0.0
    %94 = vmatpush1.msra.mxu0 0.0
    %95 = vmatprep.subr.mxu0 0.0
    %96 = vmatpush1.msra.mxu0 0.0
    %97 = vmatprep.subr.mxu0 0.0
    %98 = vmatpush1.msra.mxu0 0.0
    %99 = vmatprep.subr.mxu0 0.0
    %100 = vmatpush1.msra.mxu0 0.0
    %101 = vmatprep.subr.mxu0 0.0
    %102 = vmatpush1.msra.mxu0 0.0
    %103 = vmatprep.subr.mxu0 0.0
    %104 = vmatpush1.msra.mxu0 0.0
    %105 = vmatprep.subr.mxu0 0.0
    %106 = vmatpush1.msra.mxu0 0.0
    %107 = vmatprep.subr.mxu0 0.0
    %108 = vmatpush1.msra.mxu0 0.0
    %109 = vmatprep.subr.mxu0 0.0
    %110 = vmatpush1.msra.mxu0 0.0
    %111 = vmatprep.subr.mxu0 0.0
    %112 = vmatpush1.msra.mxu0 0.0
    %113 = vmatprep.subr.mxu0 0.0
    %114 = vmatpush1.msra.mxu0 0.0
    %115 = vmatprep.subr.mxu0 0.0
    %116 = vmatpush1.msra.mxu0 0.0
    %117 = vmatprep.subr.mxu0 0.0
    %118 = vmatpush1.msra.mxu0 0.0
    %119 = vmatprep.subr.mxu0 0.0
    %120 = vmatpush1.msra.mxu0 0.0
    %121 = vmatprep.subr.mxu0 0.0
    %122 = vmatpush1.msra.mxu0 0.0
    %123 = vmatprep.subr.mxu0 0.0
    %124 = vmatpush1.msra.mxu0 0.0
    %125 = vmatprep.subr.mxu0 0.0
    %126 = vmatpush1.msra.mxu0 0.0
    %127 = vmatprep.subr.mxu0 0.0
    %128 = vmatpush1.msra.mxu0 0.0
    %129 = vmatprep.subr.mxu0 0.0
    %130 = vmatpush1.msra.mxu0 0.0
    %131 = vmatprep.subr.mxu0 0.0
    %132 = vmatpush1.msra.mxu0 0.0
    %133 = vmatprep.subr.mxu0 0.0
    %134 = vmatpush1.msra.mxu0 0.0
    %135 = vmatprep.subr.mxu0 0.0
    %136 = vmatpush1.msra.mxu0 0.0
    %137 = vmatprep.mubr.f32.mxu0 0.0
    %138 = vmatmul.mubr.f32.gmra.mrb[0].mxu0 %v71
    %v139 = vpop.f32.mrb[0].mxu0
    %v140 = vadd.f32 %v67, %v139
    %v141 = vpop.f32.mrb[0].mxu0
    %142 = vdwg.mxu0
    %v143 = vmax.f32 %v140, 0.0
    %v144 = vld [vmem:[#allocation6] sm:$0xff]
    %v145 = vld [vmem:[#allocation6 + $0x8] sm:$0xff]
    %v146 = vld [vmem:[#allocation6 + $0x10] sm:$0xff]
    %v147 = vld [vmem:[#allocation6 + $0x18] sm:$0xff]
    %v148 = vld [vmem:[%s4] sm:$0x1]
    %v150 = vlaneseq
    %v151 = vshrl.u32 %v150, 7
    %v152 = vsub.s32 0, %v151
    %v153 = vrot.slane %v148, %v152
    %vm155 = vcmask 261120
    %v157 = vsel %vm155, %v143, 0
    %159 = vmatprep.subr.mxu0 0.0
    %160 = vmatpush1.msra.mxu0 %v144
    %161 = vmatprep.subr.mxu0 0.0
    %162 = vmatpush1.msra.mxu0 %v145
    %163 = vmatprep.subr.mxu0 0.0
    %164 = vmatpush1.msra.mxu0 %v146
    %165 = vmatprep.subr.mxu0 0.0
    %166 = vmatpush1.msra.mxu0 %v147
    %167 = vmatprep.subr.mxu0 0.0
    %168 = vmatpush1.msra.mxu0 0.0
    %169 = vmatprep.subr.mxu0 0.0
    %170 = vmatpush1.msra.mxu0 0.0
    %171 = vmatprep.subr.mxu0 0.0
    %172 = vmatpush1.msra.mxu0 0.0
    %173 = vmatprep.subr.mxu0 0.0
    %174 = vmatpush1.msra.mxu0 0.0
    %175 = vmatprep.subr.mxu0 0.0
    %176 = vmatpush1.msra.mxu0 0.0
    %177 = vmatprep.subr.mxu0 0.0
    %178 = vmatpush1.msra.mxu0 0.0
    %179 = vmatprep.subr.mxu0 0.0
    %180 = vmatpush1.msra.mxu0 0.0
    %181 = vmatprep.subr.mxu0 0.0
    %182 = vmatpush1.msra.mxu0 0.0
    %183 = vmatprep.subr.mxu0 0.0
    %184 = vmatpush1.msra.mxu0 0.0
    %185 = vmatprep.subr.mxu0 0.0
    %186 = vmatpush1.msra.mxu0 0.0
    %187 = vmatprep.subr.mxu0 0.0
    %188 = vmatpush1.msra.mxu0 0.0
    %189 = vmatprep.subr.mxu0 0.0
    %190 = vmatpush1.msra.mxu0 0.0
    %191 = vmatprep.subr.mxu0 0.0
    %192 = vmatpush1.msra.mxu0 0.0
    %193 = vmatprep.subr.mxu0 0.0
    %194 = vmatpush1.msra.mxu0 0.0
    %195 = vmatprep.subr.mxu0 0.0
    %196 = vmatpush1.msra.mxu0 0.0
    %197 = vmatprep.subr.mxu0 0.0
    %198 = vmatpush1.msra.mxu0 0.0
    %199 = vmatprep.subr.mxu0 0.0
    %200 = vmatpush1.msra.mxu0 0.0
    %201 = vmatprep.subr.mxu0 0.0
    %202 = vmatpush1.msra.mxu0 0.0
    %203 = vmatprep.subr.mxu0 0.0
    %204 = vmatpush1.msra.mxu0 0.0
    %205 = vmatprep.subr.mxu0 0.0
    %206 = vmatpush1.msra.mxu0 0.0
    %207 = vmatprep.subr.mxu0 0.0
    %208 = vmatpush1.msra.mxu0 0.0
    %209 = vmatprep.subr.mxu0 0.0
    %210 = vmatpush1.msra.mxu0 0.0
    %211 = vmatprep.subr.mxu0 0.0
    %212 = vmatpush1.msra.mxu0 0.0
    %213 = vmatprep.subr.mxu0 0.0
    %214 = vmatpush1.msra.mxu0 0.0
    %215 = vmatprep.subr.mxu0 0.0
    %216 = vmatpush1.msra.mxu0 0.0
    %217 = vmatprep.subr.mxu0 0.0
    %218 = vmatpush1.msra.mxu0 0.0
    %219 = vmatprep.subr.mxu0 0.0
    %220 = vmatpush1.msra.mxu0 0.0
    %221 = vmatprep.subr.mxu0 0.0
    %222 = vmatpush1.msra.mxu0 0.0
    %223 = vmatprep.mubr.f32.mxu0 0.0
    %224 = vmatmul.mubr.f32.gmra.mrb[0].mxu0 %v157
    %v225 = vpop.f32.mrb[0].mxu0
    %v226 = vadd.f32 %v153, %v225
    %v227 = vpop.f32.mrb[0].mxu0
    %228 = vdwg.mxu0
    %v229 = vlaneseq
    %v230 = vand.u32 %v229, 127
    %vm231 = vcmp.ge.s32.totalorder %v230, 0
    %vm232 = vcmp.lt.s32.totalorder %v230, 3
    %vm233 = vmand %vm231, %vm232
    %v234 = vsel %vm233, 1, 0
    %vm235 = vcmp.eq.s32.totalorder %v234, 1
    %v236 = vsel %vm235, %v226, -inf
    %vm237 = vcmask 1041408
    %v238 = vsel %vm237, %v236, -inf
    %239 = vmax.xlane.f32.xlu0 %v238
    %v240 = vpop.xlane.xlu0 %239
    %v241 = vsub.f32 %v236, %v240
    %v242 = vmul.f32 %v241, 1.442695
    %v243 = vpow.pop %v242
    %v244 = vsel %vm237, %v243, 0.0
    %245 = vadd.xlane.f32.xlu0 %v244
    %v246 = vpop.xlane.xlu0 %245
    %v247 = vrcp.pop %v246
    %v248 = vmul.f32 %v243, %v247
    %v249 = vsel %vm235, %v248, 0.0
    %vm250 = vcmp.ge.s32.totalorder %v230, 3
    %vm251 = vcmp.lt.s32.totalorder %v230, 8
    %vm252 = vmand %vm250, %vm251
    %v253 = vsel %vm252, 1, 0
    %vm254 = vcmp.eq.s32.totalorder %v253, 1
    %v255 = vsel %vm254, %v226, -inf
    %v256 = vsel %vm237, %v255, -inf
    %257 = vmax.xlane.f32.xlu0 %v256
    %v258 = vpop.xlane.xlu0 %257
    %v259 = vsub.f32 %v255, %v258
    %v260 = vmul.f32 %v259, 1.442695
    %v261 = vpow.pop %v260
    %v262 = vsel %vm237, %v261, 0.0
    %263 = vadd.xlane.f32.xlu0 %v262
    %v264 = vpop.xlane.xlu0 %263
    %v265 = vrcp.pop %v264
    %v266 = vmul.f32 %v261, %v265
    %v267 = vsel %vm254, %v266, %v249
    %vm268 = vcmp.ge.s32.totalorder %v230, 8
    %vm269 = vcmp.lt.s32.totalorder %v230, 12
    %vm270 = vmand %vm268, %vm269
    %v271 = vsub.f32 0.0, %v226
    %v272 = vmul.f32 %v271, 1.442695
    %v273 = vpow.pop %v272
    %v274 = vadd.f32 %v273, 1.0
    %v275 = vrcp.pop %v274
    %v276 = vmul.f32 1.0, %v275
    %v277 = vsel %vm270, 1, 0
    %vm278 = vcmp.eq.s32.totalorder %v277, 1
    %v279 = vsel %vm278, %v276, %v267
    %vm280 = vcmp.ge.s32.totalorder %v230, 12
    %vm281 = vcmp.lt.s32.totalorder %v230, 16
    %vm282 = vmand %vm280, %vm281
    %v283 = vmax.f32 %v226, 0.0
    %v284 = vand.u32 2147483647, %v226
    %v285 = vsub.f32 0.0, %v284
    %v286 = vmul.f32 %v285, 1.442695
    %v287 = vpow.pop %v286
    %v288 = vadd.f32 %v287, 1.0
    %v289 = vlog2.pop %v288
    %v290 = vmul.f32 %v289, 0.6931472
    %v291 = vmul.f32 -0.5, %v287
    %v292 = vadd.f32 %v291, 1.0
    %v293 = vmul.f32 %v292, %v287
    %v294 = vand.u32 2147483647, %v287
    %vm295 = vcmp.lt.f32.partialorder %v294, 0.0004427343
    %v296 = vsel %vm295, %v293, %v290
    %v297 = vadd.f32 %v283, %v296
    %v298 = vadd.f32 %v297, 1e-05
    %v299 = vsel %vm282, 1, 0
    %vm300 = vcmp.eq.s32.totalorder %v299, 1
    %v301 = vsel %vm300, %v298, %v279
    %302 = vst [vmem:[%s5] sm:$0x3] %v301
    // Predicated region
    $region34: #{mixed_policy_net_forward.1} parent=1 // pred_check
      _
    $region35: #{mixed_policy_net_forward.1} parent=1 // pred_check_branch
      %304 = sbr.rel (0) target = $region37
    $region36: #{mixed_policy_net_forward.1} parent=1 // pred_region
      _
    $region37: #{mixed_policy_net_forward.1} parent=1 // pred_fallthru
      _
    // Predicated region
    $region38: #{mixed_policy_net_forward.1} parent=1 // pred_check
      _
    $region39: #{mixed_policy_net_forward.1} parent=1 // pred_check_branch
      %306 = sbr.rel (0) target = $region41
    $region40: #{mixed_policy_net_forward.1} parent=1 // pred_region
      _
    $region41: #{mixed_policy_net_forward.1} parent=1 // pred_fallthru
      _
    %307 = vsyncpa [#allocation3], 1
    %308 = vsyncpa [#allocation5], 1

</llo_original>
